<compile_context>
chip_gen: v7x
topology: tpu7x:2x2x1
jax: 0.10.0
libtpu: 0.0.40
codegen_flags: <defaults>
</compile_context>

<pallas_src>
import functools

import jax
import jax.numpy as jnp
from jax.experimental import pallas as pl
from jax.experimental.pallas import tpu as pltpu


def _channel_pad_kernel(x_ref, o_ref, *, pad_lanes, data_lanes):
    # x_ref block: (bn, c*s)   o_ref block: (bn, (c + 2*pad)*s),  s = Ho*Wo.
    # Every output lane is written exactly once: zeros into the two flattened
    # channel-pad bands, the subsampled activations into the middle band.
    bn = o_ref.shape[0]
    if pad_lanes > 0:
        zeros = jnp.zeros((bn, pad_lanes), dtype=o_ref.dtype)
        o_ref[:, :pad_lanes] = zeros
        o_ref[:, pad_lanes + data_lanes:] = zeros
    o_ref[:, pad_lanes:pad_lanes + data_lanes] = x_ref[...].astype(o_ref.dtype)


def _pick_batch_block(n, bytes_per_row, target_bytes=12 << 20):
    """Pick the batch-chunk (sublane) block size.

    Valid sizes under the (8,128) BlockSpec rule: n itself (block == full
    array dim) or any multiple of 8 that divides n.  Preference order:
      1. fits the ~target_bytes per-step budget with an even grid length >= 4
         (keeps both v7x TCs double-buffered),
      2. fits the budget with >= 2 steps,
      3. fits the budget,
      4. smallest valid block.
    """
    cands = {n} | {d for d in range(8, n + 1, 8) if n % d == 0}
    cap = max(1, target_bytes // max(bytes_per_row, 1))

    def steps(d):
        return n // d

    preds = (
        lambda d: d <= cap and steps(d) >= 4 and steps(d) % 2 == 0,
        lambda d: d <= cap and steps(d) >= 2,
        lambda d: d <= cap,
    )
    for pred in preds:
        good = [d for d in cands if pred(d)]
        if good:
            return max(good)
    return min(cands)


def lambda_layer_option_a(x, planes):
    """Pallas implementation of LambdaLayer(option-A shortcut)."""
    n, c, h, w = x.shape
    pad = planes // 4
    ho, wo = (h + 1) // 2, (w + 1) // 2   # x[:, :, ::2, ::2] -> ceil sizes
    c_out = c + 2 * pad
    s = ho * wo

    # Wrapper-side stride-2 decimation (see TODO above), flattened so the
    # kernel sees a single lane-dense last dim of length c*s.
    sub = x[:, :, ::2, ::2].reshape(n, c * s)

    itemsize = jnp.dtype(x.dtype).itemsize
    bytes_per_row = (c + c_out) * s * itemsize
    bn = _pick_batch_block(n, bytes_per_row)

    step_bytes = bn * bytes_per_row
    vmem_limit = int(min(64 << 20, max(48 << 20, 4 * step_bytes)))

    kernel = functools.partial(
        _channel_pad_kernel, pad_lanes=pad * s, data_lanes=c * s)

    out_flat = pl.pallas_call(
        kernel,
        out_shape=jax.ShapeDtypeStruct((n, c_out * s), x.dtype),
        grid=(n // bn,),
        in_specs=[pl.BlockSpec((bn, c * s), lambda i: (i, 0))],
        out_specs=pl.BlockSpec((bn, c_out * s), lambda i: (i, 0)),
        compiler_params=pltpu.CompilerParams(
            dimension_semantics=("parallel",),
            vmem_limit_bytes=vmem_limit,
        ),
    )(sub)

    # Metadata-only reshape back to NCHW for the caller.
    return out_flat.reshape(n, c_out, ho, wo)


def _reference(x, planes):
    pad = planes // 4
    sub = x[:, :, ::2, ::2]
    return jnp.pad(sub, ((0, 0), (pad, pad), (0, 0), (0, 0)))


if __name__ == "__main__":
    key = jax.random.PRNGKey(0)
    N, C, H, W = 2, 4, 16, 16
    planes = 8  # pad = planes // 4 = 2  ->  out channels = 4 + 4 = 8
    x = jax.random.normal(key, (N, C, H, W), dtype=jnp.float32)

    out = jax.block_until_ready(lambda_layer_option_a(x, planes))
    ref = _reference(x, planes)

    ho, wo = (H + 1) // 2, (W + 1) // 2
    assert out.shape == (N, C + 2 * (planes // 4), ho, wo), out.shape
    assert out.dtype == x.dtype
    assert jnp.array_equal(out, ref), "mismatch vs reference"
    print("KERNEL_OK")
</pallas_src>

<mosaic_0001>
module attributes {stable_mosaic.version = 11 : i64} {
  func.func @_channel_pad_kernel(%arg0: i32, %arg1: memref<2x256xf32, #tpu.memory_space<vmem>>, %arg2: memref<2x512xf32, #tpu.memory_space<vmem>>) attributes {dimension_semantics = [#tpu.dimension_semantics<parallel>], iteration_bounds = array<i64: 1>, scalar_prefetch = 0 : i64, scratch_operands = 0 : i64, tpu.core_type = #tpu.core_type<tc>, window_params = [{transform_indices = @transform_0, window_bounds = array<i64: 2, 256>}, {transform_indices = @transform_1, window_bounds = array<i64: 2, 512>}]} {
    %cst = arith.constant 0.000000e+00 : f32
    %0 = vector.broadcast %cst : f32 to vector<2x128xf32>
    %c0 = arith.constant 0 : index
    %c0_0 = arith.constant 0 : index
    %1 = vector.load %arg2[%c0, %c0_0] : memref<2x512xf32, #tpu.memory_space<vmem>>, vector<2x128xf32>
    tpu.vector_store %arg2[%c0, %c0_0], %0 {strides = array<i32>} : memref<2x512xf32, #tpu.memory_space<vmem>>, vector<2x128xf32>,
    %c0_1 = arith.constant 0 : index
    %c384 = arith.constant 384 : index
    %2 = vector.load %arg2[%c0_1, %c384] : memref<2x512xf32, #tpu.memory_space<vmem>>, vector<2x128xf32>
    tpu.vector_store %arg2[%c0_1, %c384], %0 {strides = array<i32>} : memref<2x512xf32, #tpu.memory_space<vmem>>, vector<2x128xf32>,
    %c0_2 = arith.constant 0 : index
    %c0_3 = arith.constant 0 : index
    %3 = vector.load %arg1[%c0_2, %c0_3] : memref<2x256xf32, #tpu.memory_space<vmem>>, vector<2x256xf32>
    %c0_4 = arith.constant 0 : index
    %c128 = arith.constant 128 : index
    %4 = vector.load %arg2[%c0_4, %c128] : memref<2x512xf32, #tpu.memory_space<vmem>>, vector<2x256xf32>
    tpu.vector_store %arg2[%c0_4, %c128], %3 {strides = array<i32>} : memref<2x512xf32, #tpu.memory_space<vmem>>, vector<2x256xf32>,
    return
  }
  func.func @transform_0(%arg0: i32) -> (i32, i32) {
    %c0_i32 = arith.constant 0 : i32
    %c0_i32_0 = arith.constant 0 : i32
    return %arg0, %c0_i32 : i32, i32
  }
  func.func @transform_1(%arg0: i32) -> (i32, i32) {
    %c0_i32 = arith.constant 0 : i32
    %c0_i32_0 = arith.constant 0 : i32
    return %arg0, %c0_i32 : i32, i32
  }
}

</mosaic_0001>

<llo_original>
// kernel: tpu_custom_call.1
$region0: #{tpu_custom_call.1}
  #allocation0 [shape = 'u32[]', space=smem, size = 0x4, offset = 0x4, fixed_abs, tag = 'smem constant byte address 0x4 - core index']
  #allocation1 [shape = 'u32[144,128]{1,0:T(1,128)}', space=vmem, size = 0x12000, scoped, tag = 'internal scratch']
  %s0 = inlined_call_operand.hbm [shape: f32[2,256], index: 0, kind: input, shape index: {}]
  %s1 = inlined_call_operand.hbm [shape: f32[2,512], index: 1, kind: output, shape index: {}]
  %s2 = sld [smem:[#allocation0]]
  $region18: #{tpu_custom_call.1} parent=0
    _
  %s4 = ssub.s32 1, %s2
  %s5 = scalar_select 0, %s4, %s2
  $region1: #{tpu_custom_call.1} parent=0
    #allocation2 [shape = 'u8[2048]{0}', space=vmem, size = 0x800, scoped, tag = 'input window, operand 0, single buffered']
    #allocation3 [shape = 's32[1]{0}', space=sflag, size = 0x4, scoped, tag = 'scoped memory for tpu_custom_call.1']
    #allocation4 [shape = 's32[1]{0}', space=sflag, size = 0x4, scoped, tag = 'scoped memory for tpu_custom_call.1']
    #allocation5 [shape = 'u8[4096]{0}', space=vmem, size = 0x1000, scoped, tag = 'output window, operand 0, single buffered']
    %6 = vsyncpa [#allocation3], 0
    %7 = vsyncpa [#allocation4], 0
    // Predicated region
    $region2: #{tpu_custom_call.1} parent=1 // pred_check
      _
    $region3: #{tpu_custom_call.1} parent=1 // pred_check_branch
      %9 = sbr.rel (0) target = $region5
    $region4: #{tpu_custom_call.1} parent=1 // pred_region
      %s11 = ssub.s32 64, 64
      %12 = vsyncadd [#allocation3], %s11
      %s14 = sshll.u32 [#allocation2], 4
      %s15 = int_to_ptr.vmem [resolvable:$true] %s14
      %17 = dma.hbm_to_vmem [thread:$0]  %s0, 64, %s15, [#allocation3]
    $region5: #{tpu_custom_call.1} parent=1 // pred_fallthru
      _
    // Predicated region
    $region6: #{tpu_custom_call.1} parent=1 // pred_check
      _
    $region7: #{tpu_custom_call.1} parent=1 // pred_check_branch
      %19 = sbr.rel (0) target = $region9
    $region8: #{tpu_custom_call.1} parent=1 // pred_region
      %20 = dma.done [#allocation3], 64
    $region9: #{tpu_custom_call.1} parent=1 // pred_fallthru
      _
    %21 = vst [vmem:[#allocation5] sm:$0x3] 0.0
    %22 = vst [vmem:[#allocation5 + $0x6] sm:$0x3] 0.0
    %v23 = vld [vmem:[#allocation2] sm:$0xf]
    %24 = vst [vmem:[#allocation5 + $0x2] sm:$0xf] %v23
    // Predicated region
    $region10: #{tpu_custom_call.1} parent=1 // pred_check
      _
    $region11: #{tpu_custom_call.1} parent=1 // pred_check_branch
      %26 = sbr.rel (0) target = $region13
    $region12: #{tpu_custom_call.1} parent=1 // pred_region
      %s28 = ssub.s32 128, 128
      %29 = vsyncadd [#allocation4], %s28
      %s31 = sshll.u32 [#allocation5], 4
      %s32 = int_to_ptr.vmem [resolvable:$true] %s31
      %34 = dma.vmem_to_hbm [thread:$0]  %s32, 128, %s1, [#allocation4]
    $region13: #{tpu_custom_call.1} parent=1 // pred_fallthru
      _
    // Predicated region
    $region14: #{tpu_custom_call.1} parent=1 // pred_check
      _
    $region15: #{tpu_custom_call.1} parent=1 // pred_check_branch
      %36 = sbr.rel (0) target = $region17
    $region16: #{tpu_custom_call.1} parent=1 // pred_region
      %37 = dma.done [#allocation4], 128
    $region17: #{tpu_custom_call.1} parent=1 // pred_fallthru
      _
    %38 = vsyncpa [#allocation3], 1
    %39 = vsyncpa [#allocation4], 1

</llo_original>
